<compile_context>
chip_gen: v5e
topology: v5e:2x2
jax: 0.10.0
libtpu: 0.0.40
codegen_flags: <defaults>
</compile_context>

<pallas_src>
import jax
import jax.numpy as jnp
from jax.experimental import pallas as pl
from jax.experimental.pallas import tpu as pltpu

TM_MAX = 1024  # voxels (lanes) per tile; 512-2048 keeps per-step overhead amortized.
               # VMEM per step at Cin=4/Cout=8 is ~100 KB double-buffered; re-budget
               # (vmem_limit_bytes) if channel counts grow to the hundreds.


def _round_up(a, b):
    return pl.cdiv(a, b) * b


def conv_stats_kernel(w_ref, x_ref, stats_ref):
    """1x1x1 conv (channels-major matmul) + per-tile per-channel sum / sumsq.

    w_ref:     (Cout, Cin)
    x_ref:     (Cin, TM)   voxels on the lane axis
    stats_ref: (1, Cout, 2) per-tile partials (col 0: sum, col 1: sumsq)
    """
    y = jnp.dot(w_ref[...], x_ref[...], preferred_element_type=jnp.float32)  # (Cout, TM)
    s = jnp.sum(y, axis=1, keepdims=True)        # (Cout, 1)
    sq = jnp.sum(y * y, axis=1, keepdims=True)   # (Cout, 1)
    stats_ref[...] = jnp.concatenate([s, sq], axis=1)[None, :, :]


def conv_bn_relu_kernel(w_ref, scale_ref, shift_ref, x_ref, o_ref):
    """Recompute the 1x1x1 conv and fuse BN (per-channel scale/shift) + ReLU.

    w_ref: (Cout, Cin); scale_ref/shift_ref: (Cout, 1); x_ref: (Cin, TM); o_ref: (Cout, TM)
    """
    y = jnp.dot(w_ref[...], x_ref[...], preferred_element_type=jnp.float32)  # (Cout, TM)
    o_ref[...] = jnp.maximum(y * scale_ref[...] + shift_ref[...], 0.0)


@jax.jit
def gating_block_forward(x, w, b, gamma, beta, eps=1e-5):
    """x: (N, Cin, D, H, W); w: (Cout, Cin) [1x1x1 conv]; b, gamma, beta: (Cout,)."""
    del b  # Conv bias cancels exactly under train-mode BatchNorm (mean subtraction).

    N, Cin, D, H, W = x.shape
    Cout = w.shape[0]
    M = N * D * H * W

    tm = min(TM_MAX, _round_up(M, 128))
    M_pad = _round_up(M, tm)
    num_tiles = M_pad // tm

    # Channels-major, lane-dense flattening: (Cin, M); cheap leading-dim permute.
    x2d = jnp.transpose(x, (1, 0, 2, 3, 4)).reshape(Cin, M).astype(jnp.float32)
    if M_pad != M:
        x2d = jnp.pad(x2d, ((0, 0), (0, M_pad - M)))
    w2d = jnp.asarray(w, jnp.float32)  # (Cout, Cin)

    # Pass 1: conv + per-tile per-channel sum/sumsq partials ("parallel" grid axis).
    stats = pl.pallas_call(
        conv_stats_kernel,
        out_shape=jax.ShapeDtypeStruct((num_tiles, Cout, 2), jnp.float32),
        grid_spec=pltpu.PrefetchScalarGridSpec(
            num_scalar_prefetch=0,
            grid=(num_tiles,),
            in_specs=[
                pl.BlockSpec((Cout, Cin), lambda i: (0, 0)),
                pl.BlockSpec((Cin, tm), lambda i: (0, i)),
            ],
            out_specs=pl.BlockSpec((1, Cout, 2), lambda i: (i, 0, 0)),
        ),
        compiler_params=pltpu.CompilerParams(dimension_semantics=("parallel",)),
    )(w2d, x2d)

    # Tiny per-channel glue: fold batch statistics + gamma/beta into scale/shift.
    sums = jnp.sum(stats[:, :, 0], axis=0)  # (Cout,)
    sqs = jnp.sum(stats[:, :, 1], axis=0)   # (Cout,)
    mean = sums / M
    # One-pass E[y^2] - E[y]^2 (clamped against tiny negative cancellation noise).
    var = jnp.maximum(sqs / M - mean * mean, 0.0)
    scale = gamma.astype(jnp.float32) / jnp.sqrt(var + eps)
    shift = beta.astype(jnp.float32) - mean * scale

    # Pass 2: conv recomputed + fused normalize + ReLU, lane-dense (Cout, TM) output.
    out2d = pl.pallas_call(
        conv_bn_relu_kernel,
        out_shape=jax.ShapeDtypeStruct((Cout, M_pad), jnp.float32),
        grid_spec=pltpu.PrefetchScalarGridSpec(
            num_scalar_prefetch=0,
            grid=(num_tiles,),
            in_specs=[
                pl.BlockSpec((Cout, Cin), lambda i: (0, 0)),
                pl.BlockSpec((Cout, 1), lambda i: (0, 0)),
                pl.BlockSpec((Cout, 1), lambda i: (0, 0)),
                pl.BlockSpec((Cin, tm), lambda i: (0, i)),
            ],
            out_specs=pl.BlockSpec((Cout, tm), lambda i: (0, i)),
        ),
        compiler_params=pltpu.CompilerParams(dimension_semantics=("parallel",)),
    )(w2d, scale.reshape(Cout, 1), shift.reshape(Cout, 1), x2d)

    out = out2d[:, :M].reshape(Cout, N, D, H, W)
    return jnp.transpose(out, (1, 0, 2, 3, 4))  # (N, Cout, D, H, W)


def reference_forward(x, w, b, gamma, beta, eps=1e-5):
    """Plain-JAX reference matching PyTorch Conv3d(k=1) + BatchNorm3d(train) + ReLU."""
    y = jnp.einsum("ncdhw,oc->nodhw", x, w) + b[None, :, None, None, None]
    mean = y.mean(axis=(0, 2, 3, 4), keepdims=True)
    var = ((y - mean) ** 2).mean(axis=(0, 2, 3, 4), keepdims=True)
    yn = (y - mean) / jnp.sqrt(var + eps)
    yn = yn * gamma[None, :, None, None, None] + beta[None, :, None, None, None]
    return jnp.maximum(yn, 0.0)


if __name__ == "__main__":
    # Small shapes consistent with a 3-D gating block; M = 1200 exercises the
    # multi-tile grid and the padded tail (tm = 1024, M_pad = 2048).
    N, Cin, D, H, W = 2, 4, 6, 10, 10
    Cout = 8

    key = jax.random.PRNGKey(0)
    kx, kw, kb, kg, kbt = jax.random.split(key, 5)

    x = jax.random.normal(kx, (N, Cin, D, H, W), dtype=jnp.float32)
    # Deterministic synthetic parameters (Conv3d weight/bias, BN gamma/beta).
    conv_w = jax.random.normal(kw, (Cout, Cin), dtype=jnp.float32) * 0.1
    conv_b = jax.random.normal(kb, (Cout,), dtype=jnp.float32) * 0.1
    bn_gamma = 1.0 + 0.1 * jax.random.normal(kg, (Cout,), dtype=jnp.float32)
    bn_beta = 0.1 * jax.random.normal(kbt, (Cout,), dtype=jnp.float32)

    out = gating_block_forward(x, conv_w, conv_b, bn_gamma, bn_beta)
    out = jax.block_until_ready(out)

    ref = reference_forward(x, conv_w, conv_b, bn_gamma, bn_beta)
    assert out.shape == (N, Cout, D, H, W)
    assert jnp.allclose(out, ref, atol=1e-3, rtol=1e-3), "mismatch vs reference"

    print("KERNEL_OK")
</pallas_src>

<mosaic_0001>
module attributes {stable_mosaic.version = 11 : i64} {
  func.func @conv_stats_kernel(%arg0: i32, %arg1: memref<8x4xf32, #tpu.memory_space<vmem>>, %arg2: memref<4x1024xf32, #tpu.memory_space<vmem>>, %arg3: memref<1x8x2xf32, #tpu.memory_space<vmem>>) attributes {dimension_semantics = [#tpu.dimension_semantics<parallel>], iteration_bounds = array<i64: 2>, scalar_prefetch = 0 : i64, scratch_operands = 0 : i64, tpu.core_type = #tpu.core_type<tc>, window_params = [{pipeline_mode = #tpu.pipeline_mode<synchronous>, transform_indices = @transform_0, window_bounds = array<i64: 8, 4>}, {transform_indices = @transform_1, window_bounds = array<i64: 4, 1024>}, {transform_indices = @transform_2, window_bounds = array<i64: 1, 8, 2>}]} {
    %c0 = arith.constant 0 : index
    %c0_0 = arith.constant 0 : index
    %0 = vector.load %arg1[%c0, %c0_0] : memref<8x4xf32, #tpu.memory_space<vmem>>, vector<8x4xf32>
    %c0_1 = arith.constant 0 : index
    %c0_2 = arith.constant 0 : index
    %1 = vector.load %arg2[%c0_1, %c0_2] : memref<4x1024xf32, #tpu.memory_space<vmem>>, vector<4x1024xf32>
    %cst = arith.constant dense<0.000000e+00> : vector<8x1024xf32>
    %2 = tpu.matmul %0, %1, %cst {dimension_numbers = #tpu.dot_dimension_numbers<[1], [0], [0], [1], [0, 0, 1, 1], [], []>} : vector<8x4xf32>, vector<4x1024xf32>, vector<8x1024xf32> -> vector<8x1024xf32>
    %cst_3 = arith.constant dense<0.000000e+00> : vector<8xf32>
    %3 = vector.multi_reduction <add>, %2, %cst_3 [1] : vector<8x1024xf32> to vector<8xf32>
    %4 = vector.shape_cast %3 : vector<8xf32> to vector<8x1xf32>
    %5 = arith.mulf %2, %2 : vector<8x1024xf32>
    %cst_4 = arith.constant dense<0.000000e+00> : vector<8xf32>
    %6 = vector.multi_reduction <add>, %5, %cst_4 [1] : vector<8x1024xf32> to vector<8xf32>
    %7 = vector.shape_cast %6 : vector<8xf32> to vector<8x1xf32>
    %8 = tpu.concatenate %4, %7 in 1 : vector<8x1xf32>, vector<8x1xf32> -> vector<8x2xf32>
    %9 = vector.shape_cast %8 : vector<8x2xf32> to vector<1x8x2xf32>
    %c0_5 = arith.constant 0 : index
    %c0_6 = arith.constant 0 : index
    %c0_7 = arith.constant 0 : index
    %10 = vector.load %arg3[%c0_5, %c0_6, %c0_7] : memref<1x8x2xf32, #tpu.memory_space<vmem>>, vector<1x8x2xf32>
    tpu.vector_store %arg3[%c0_5, %c0_6, %c0_7], %9 {strides = array<i32>} : memref<1x8x2xf32, #tpu.memory_space<vmem>>, vector<1x8x2xf32>,
    return
  }
  func.func @transform_0(%arg0: i32) -> (i32, i32) {
    %c0_i32 = arith.constant 0 : i32
    %c0_i32_0 = arith.constant 0 : i32
    %c0_i32_1 = arith.constant 0 : i32
    return %c0_i32, %c0_i32_0 : i32, i32
  }
  func.func @transform_1(%arg0: i32) -> (i32, i32) {
    %c0_i32 = arith.constant 0 : i32
    %c0_i32_0 = arith.constant 0 : i32
    return %c0_i32, %arg0 : i32, i32
  }
  func.func @transform_2(%arg0: i32) -> (i32, i32, i32) {
    %c0_i32 = arith.constant 0 : i32
    %c0_i32_0 = arith.constant 0 : i32
    %c0_i32_1 = arith.constant 0 : i32
    return %arg0, %c0_i32, %c0_i32_0 : i32, i32, i32
  }
}

module attributes {stable_mosaic.version = 11 : i64} {
  func.func @conv_bn_relu_kernel(%arg0: i32, %arg1: memref<8x4xf32, #tpu.memory_space<vmem>>, %arg2: memref<8x1xf32, #tpu.memory_space<vmem>>, %arg3: memref<8x1xf32, #tpu.memory_space<vmem>>, %arg4: memref<4x1024xf32, #tpu.memory_space<vmem>>, %arg5: memref<8x1024xf32, #tpu.memory_space<vmem>>) attributes {dimension_semantics = [#tpu.dimension_semantics<parallel>], iteration_bounds = array<i64: 2>, scalar_prefetch = 0 : i64, scratch_operands = 0 : i64, tpu.core_type = #tpu.core_type<tc>, window_params = [{pipeline_mode = #tpu.pipeline_mode<synchronous>, transform_indices = @transform_0, window_bounds = array<i64: 8, 4>}, {pipeline_mode = #tpu.pipeline_mode<synchronous>, transform_indices = @transform_1, window_bounds = array<i64: 8, 1>}, {pipeline_mode = #tpu.pipeline_mode<synchronous>, transform_indices = @transform_2, window_bounds = array<i64: 8, 1>}, {transform_indices = @transform_3, window_bounds = array<i64: 4, 1024>}, {transform_indices = @transform_4, window_bounds = array<i64: 8, 1024>}]} {
    %c0 = arith.constant 0 : index
    %c0_0 = arith.constant 0 : index
    %0 = vector.load %arg1[%c0, %c0_0] : memref<8x4xf32, #tpu.memory_space<vmem>>, vector<8x4xf32>
    %c0_1 = arith.constant 0 : index
    %c0_2 = arith.constant 0 : index
    %1 = vector.load %arg4[%c0_1, %c0_2] : memref<4x1024xf32, #tpu.memory_space<vmem>>, vector<4x1024xf32>
    %cst = arith.constant dense<0.000000e+00> : vector<8x1024xf32>
    %2 = tpu.matmul %0, %1, %cst {dimension_numbers = #tpu.dot_dimension_numbers<[1], [0], [0], [1], [0, 0, 1, 1], [], []>} : vector<8x4xf32>, vector<4x1024xf32>, vector<8x1024xf32> -> vector<8x1024xf32>
    %c0_3 = arith.constant 0 : index
    %c0_4 = arith.constant 0 : index
    %3 = vector.load %arg2[%c0_3, %c0_4] : memref<8x1xf32, #tpu.memory_space<vmem>>, vector<8x1xf32>
    %4 = vector.broadcast %3 : vector<8x1xf32> to vector<8x1024xf32>
    %5 = arith.mulf %2, %4 : vector<8x1024xf32>
    %c0_5 = arith.constant 0 : index
    %c0_6 = arith.constant 0 : index
    %6 = vector.load %arg3[%c0_5, %c0_6] : memref<8x1xf32, #tpu.memory_space<vmem>>, vector<8x1xf32>
    %7 = vector.broadcast %6 : vector<8x1xf32> to vector<8x1024xf32>
    %8 = arith.addf %5, %7 : vector<8x1024xf32>
    %cst_7 = arith.constant 0.000000e+00 : f32
    %9 = vector.broadcast %cst_7 : f32 to vector<8x1024xf32>
    %10 = arith.maximumf %8, %9 : vector<8x1024xf32>
    %c0_8 = arith.constant 0 : index
    %c0_9 = arith.constant 0 : index
    %11 = vector.load %arg5[%c0_8, %c0_9] : memref<8x1024xf32, #tpu.memory_space<vmem>>, vector<8x1024xf32>
    tpu.vector_store %arg5[%c0_8, %c0_9], %10 {strides = array<i32>} : memref<8x1024xf32, #tpu.memory_space<vmem>>, vector<8x1024xf32>,
    return
  }
  func.func @transform_0(%arg0: i32) -> (i32, i32) {
    %c0_i32 = arith.constant 0 : i32
    %c0_i32_0 = arith.constant 0 : i32
    %c0_i32_1 = arith.constant 0 : i32
    return %c0_i32, %c0_i32_0 : i32, i32
  }
  func.func @transform_1(%arg0: i32) -> (i32, i32) {
    %c0_i32 = arith.constant 0 : i32
    %c0_i32_0 = arith.constant 0 : i32
    %c0_i32_1 = arith.constant 0 : i32
    return %c0_i32, %c0_i32_0 : i32, i32
  }
  func.func @transform_2(%arg0: i32) -> (i32, i32) {
    %c0_i32 = arith.constant 0 : i32
    %c0_i32_0 = arith.constant 0 : i32
    %c0_i32_1 = arith.constant 0 : i32
    return %c0_i32, %c0_i32_0 : i32, i32
  }
  func.func @transform_3(%arg0: i32) -> (i32, i32) {
    %c0_i32 = arith.constant 0 : i32
    %c0_i32_0 = arith.constant 0 : i32
    return %c0_i32, %arg0 : i32, i32
  }
  func.func @transform_4(%arg0: i32) -> (i32, i32) {
    %c0_i32 = arith.constant 0 : i32
    %c0_i32_0 = arith.constant 0 : i32
    return %c0_i32, %arg0 : i32, i32
  }
}

</mosaic_0001>

<llo_original>
// kernel: gating_block_forward.2
$region0: #{gating_block_forward.2}
  #allocation0 [shape = 'u32[]', space=smem, size = 0x4, offset = 0x4, fixed_abs, tag = 'smem constant byte address 0x4 - core index']
  #allocation1 [shape = 'u32[72,128]{1,0:T(1,128)}', space=vmem, size = 0x9000, scoped, tag = 'internal scratch']
  %s0 = inlined_call_operand.vmem [shape: f32[8,4], index: 0, kind: input, shape index: {}]
  %s1 = inlined_call_operand.vmem [shape: f32[4,2048], index: 1, kind: input, shape index: {}]
  %s2 = inlined_call_operand.vmem [shape: f32[2,8,2], index: 2, kind: output, shape index: {}]
  %s3 = sld [smem:[#allocation0]]
  $region41: #{gating_block_forward.2} parent=0
    _
  %s5 = ssub.s32 1, %s3
  %s6 = scalar_select 0, %s5, %s3
  loop: start=0, step=1, limit=4
  $region2: #{gating_block_forward.2} parent=0 // loop_pre_header
    _
  $region3: #{gating_block_forward.2} parent=0 // loop_header
    %s8 = sphi 0, %s12
    %p9 = scmp.ge.s32.totalorder %s8, 4
    %s16 = sphi 0, %s16
    %s18 = sphi 0, %s16
    %s19 = sphi 0, %s18
    %s33 = sphi 0, %s19
    %s39 = sphi 0, %s41
    %s42 = sphi 0, %s39
    %s43 = sphi 0, %s42
    %s59 = sphi 0, %s43
    %s65 = sphi 0, %s67
    %s68 = sphi 0, %s65
    %s69 = sphi 0, %s68
    %s85 = sphi 0, %s69
  $region4: #{gating_block_forward.2} parent=0 // loop_header_branch
    %11 = sbr.rel (%p9) target = $region8
  $region5: #{gating_block_forward.2} parent=0 // loop_body
    %s13 = ssub.s32 %s8, 1
    %s14 = ssub.s32 %s8, 2
    %s15 = sadd.s32 %s8, 1
    %s17 = sadd.s32 %s16, 1
    %p20 = scmp.eq.s32.totalorder %s8, 1
    %p21 = scmp.ne.s32.totalorder %s16, %s18
    %p22 = scmp.eq.s32.totalorder %s8, 0
    %p23 = por %p21, %p22
    %p24 = scmp.ne.s32.totalorder %s16, %s18
    %p25 = scmp.eq.s32.totalorder %s13, 1
    %p26 = por %p24, %p25
    %p27 = scmp.ne.s32.totalorder %s18, %s19
    %p28 = scmp.eq.s32.totalorder %s13, 0
    %p29 = por %p27, %p28
    %p30 = scmp.ne.s32.totalorder %s18, %s19
    %p31 = scmp.eq.s32.totalorder %s14, 1
    %p32 = por %p30, %p31
    %p34 = scmp.ne.s32.totalorder %s19, %s33
    %p35 = scmp.eq.s32.totalorder %s14, 0
    %p36 = por %p34, %p35
    %s37 = ssub.s32 %s8, %s15
    %p38 = scmp.eq.s32.totalorder %s37, 0
    %s40 = sadd.s32 %s39, 1
    %s41 = scalar_select %p38, %s39, %s40
    %p44 = pneg %p38
    %p45 = scmp.eq.s32.totalorder %s8, 1
    %p46 = por %p44, %p45
    %p47 = scmp.ne.s32.totalorder %s39, %s42
    %p48 = scmp.eq.s32.totalorder %s8, 0
    %p49 = por %p47, %p48
    %p50 = scmp.ne.s32.totalorder %s39, %s42
    %p51 = scmp.eq.s32.totalorder %s13, 1
    %p52 = por %p50, %p51
    %p53 = scmp.ne.s32.totalorder %s42, %s43
    %p54 = scmp.eq.s32.totalorder %s13, 0
    %p55 = por %p53, %p54
    %p56 = scmp.ne.s32.totalorder %s42, %s43
    %p57 = scmp.eq.s32.totalorder %s14, 1
    %p58 = por %p56, %p57
    %p60 = scmp.ne.s32.totalorder %s43, %s59
    %p61 = scmp.eq.s32.totalorder %s14, 0
    %p62 = por %p60, %p61
    %s63 = ssub.s32 %s8, %s15
    %p64 = scmp.eq.s32.totalorder %s63, 0
    %s66 = sadd.s32 %s65, 1
    %s67 = scalar_select %p64, %s65, %s66
    %p70 = pneg %p64
    %p71 = scmp.eq.s32.totalorder %s8, 1
    %p72 = por %p70, %p71
    %p73 = scmp.ne.s32.totalorder %s65, %s68
    %p74 = scmp.eq.s32.totalorder %s8, 0
    %p75 = por %p73, %p74
    %p76 = scmp.ne.s32.totalorder %s65, %s68
    %p77 = scmp.eq.s32.totalorder %s13, 1
    %p78 = por %p76, %p77
    %p79 = scmp.ne.s32.totalorder %s68, %s69
    %p80 = scmp.eq.s32.totalorder %s13, 0
    %p81 = por %p79, %p80
    %p82 = scmp.ne.s32.totalorder %s68, %s69
    %p83 = scmp.eq.s32.totalorder %s14, 1
    %p84 = por %p82, %p83
    %p86 = scmp.ne.s32.totalorder %s69, %s85
    %p87 = scmp.eq.s32.totalorder %s14, 0
    %p88 = por %p86, %p87
    %p89 = scmp.le.s32.totalorder 1, %s8
    %p90 = scmp.lt.s32.totalorder %s8, 3
    %p91 = pnand %p89, %p90
    %p92 = pneg %p91
    // Predicated region
    $region9: #{gating_block_forward.2} parent=5 // pred_check
      _
    $region10: #{gating_block_forward.2} parent=5 // pred_check_branch
      %94 = sbr.rel (%p91) target = $region12
    $region11: #{gating_block_forward.2} parent=5 // pred_region
      %s95 = ssub.s32 %s8, 1
      // Predicated region
      $region13: #{gating_block_forward.2} parent=11 // pred_check
        %p96 = pneg %p29
      $region14: #{gating_block_forward.2} parent=11 // pred_check_branch
        %98 = sbr.rel (%p96) target = $region16
      $region15: #{gating_block_forward.2} parent=11 // pred_region
        _
      $region16: #{gating_block_forward.2} parent=11 // pred_fallthru
        _
    $region12: #{gating_block_forward.2} parent=5 // pred_fallthru
      _
    %p99 = scmp.lt.s32.totalorder %s8, 2
    // Predicated region
    $region17: #{gating_block_forward.2} parent=5 // pred_check
      %p100 = pneg %p99
    $region18: #{gating_block_forward.2} parent=5 // pred_check_branch
      %102 = sbr.rel (%p100) target = $region20
    $region19: #{gating_block_forward.2} parent=5 // pred_region
      // Predicated region
      $region21: #{gating_block_forward.2} parent=19 // pred_check
        %p103 = pneg %p49
      $region22: #{gating_block_forward.2} parent=19 // pred_check_branch
        %105 = sbr.rel (%p103) target = $region24
      $region23: #{gating_block_forward.2} parent=19 // pred_region
        %s106 = smul.u32 8, %s8
        %p107 = scmp.lt.s32.totalorder %s106, 15
        %s108 = scalar_select %p107, %s106, 15
        %s109 = smul.addr %s108, 4
        %s110 = scalar_lea.vmem %s1, %s109
        %s111 = smul.u32 8, %s8
      $region24: #{gating_block_forward.2} parent=19 // pred_fallthru
        _
    $region20: #{gating_block_forward.2} parent=5 // pred_fallthru
      _
    %p112 = scmp.le.s32.totalorder 1, %s8
    %p113 = scmp.lt.s32.totalorder %s8, 3
    %p114 = pnand %p112, %p113
    %p115 = pneg %p114
    // Predicated region
    $region25: #{gating_block_forward.2} parent=5 // pred_check
      _
    $region26: #{gating_block_forward.2} parent=5 // pred_check_branch
      %117 = sbr.rel (%p114) target = $region28
    $region27: #{gating_block_forward.2} parent=5 // pred_region
      %s118 = ssub.s32 %s8, 1
      %p119 = pneg %p29
      %p120 = pneg %p26
      %s121 = smul.u32 8, %s13
      %p122 = scmp.lt.s32.totalorder %s121, 15
      %s123 = scalar_select %p122, %s121, 15
      %s124 = smul.addr %s123, 4
      %s125 = scalar_lea.vmem %s1, %s124
      %p126 = pneg %p55
      %p127 = pneg %p52
      %p128 = pneg %p81
      %p129 = pneg %p78
      %p130 = scmp.lt.s32.totalorder %s13, 1
      %s131 = scalar_select %p130, %s13, 1
      %s132 = smul.addr %s131, 8
      %s133 = scalar_lea.vmem %s2, %s132
      %s134 = smul.u32 8, %s13
      %p135 = scmp.lt.s32.totalorder %s134, 15
      %s136 = scalar_select %p135, %s134, 15
      %s137 = smul.addr %s136, 4
      %s138 = scalar_lea.vmem %s1, %s137
      %s139 = smul.u32 8, %s13
      %p140 = scmp.lt.s32.totalorder %s13, 1
      %s141 = scalar_select %p140, %s13, 1
      %s142 = smul.addr %s141, 8
      %s143 = scalar_lea.vmem %s2, %s142
      %v144 = vld [vmem:[%s0] sm:$0xff]
      %v145 = vld [vmem:[%s138] sm:$0xff]
      %v146 = vld [vmem:[%s138 + $0x8] sm:$0xff]
      %v147 = vld [vmem:[%s138 + $0x10] sm:$0xff]
      %v148 = vld [vmem:[%s138 + $0x18] sm:$0xff]
      %153 = vst [vmem:[#allocation1] ss:$2 sm:$0xff] %v145
      %s154 = scalar_lea.vmem [#allocation1], 16
      %155 = vst [vmem:[%s154] ss:$2 sm:$0xff] %v146
      %s156 = scalar_lea.vmem [#allocation1], 32
      %157 = vst [vmem:[%s156] ss:$2 sm:$0xff] %v147
      %s158 = scalar_lea.vmem [#allocation1], 48
      %159 = vst [vmem:[%s158] ss:$2 sm:$0xff] %v148
      %v160 = vld.sshfl [vmem:[#allocation1] sm:$0xff pattern:$0x75316420]
      %v161 = vld.sshfl [vmem:[#allocation1 + $0x8] sm:$0xff pattern:$0x75316420]
      %v162 = vld.sshfl [vmem:[#allocation1 + $0x10] sm:$0xff pattern:$0x75316420]
      %v163 = vld.sshfl [vmem:[#allocation1 + $0x18] sm:$0xff pattern:$0x75316420]
      %v164 = vld.sshfl [vmem:[#allocation1 + $0x20] sm:$0xff pattern:$0x75316420]
      %v165 = vld.sshfl [vmem:[#allocation1 + $0x28] sm:$0xff pattern:$0x75316420]
      %v166 = vld.sshfl [vmem:[#allocation1 + $0x30] sm:$0xff pattern:$0x75316420]
      %v167 = vld.sshfl [vmem:[#allocation1 + $0x38] sm:$0xff pattern:$0x75316420]
      %vm168 = vcmask 31744
      %v170 = vsel %vm168, %v144, 0
      %vm172 = vcmask 1043456
      %v173 = vsel %vm172, %v160, 0
      %v175 = vsel %vm172, %v161, 0
      %v177 = vsel %vm172, %v162, 0
      %v179 = vsel %vm172, %v163, 0
      %v181 = vsel %vm172, %v164, 0
      %v183 = vsel %vm172, %v165, 0
      %v185 = vsel %vm172, %v166, 0
      %v187 = vsel %vm172, %v167, 0
      %189 = vmatpush.msra.mxu0 0.0
      %190 = vmatpush.msra.mxu0 0.0
      %191 = vmatpush.msra.mxu0 0.0
      %192 = vmatpush.msra.mxu0 0.0
      %193 = vmatpush.msra.mxu0 0.0
      %194 = vmatpush.msra.mxu0 0.0
      %195 = vmatpush.msra.mxu0 0.0
      %196 = vmatpush.msra.mxu0 0.0
      %197 = vmatpush.msra.mxu0 0.0
      %198 = vmatpush.msra.mxu0 0.0
      %199 = vmatpush.msra.mxu0 0.0
      %200 = vmatpush.msra.mxu0 0.0
      %201 = vmatpush.msra.mxu0 0.0
      %202 = vmatpush.msra.mxu0 0.0
      %203 = vmatpush.msra.mxu0 0.0
      %204 = vmatpush.msra.mxu0 %v173
      %205 = vmatmul.f32.gmra.mxu0 %v170
      %v206 = vpop.f32.mrf.mxu0
      %v207 = vadd.f32 0.0, %v206
      %208 = vdwg.mxu0
      %209 = vmatpush.msra.mxu0 0.0
      %210 = vmatpush.msra.mxu0 0.0
      %211 = vmatpush.msra.mxu0 0.0
      %212 = vmatpush.msra.mxu0 0.0
      %213 = vmatpush.msra.mxu0 0.0
      %214 = vmatpush.msra.mxu0 0.0
      %215 = vmatpush.msra.mxu0 0.0
      %216 = vmatpush.msra.mxu0 0.0
      %217 = vmatpush.msra.mxu0 0.0
      %218 = vmatpush.msra.mxu0 0.0
      %219 = vmatpush.msra.mxu0 0.0
      %220 = vmatpush.msra.mxu0 0.0
      %221 = vmatpush.msra.mxu0 0.0
      %222 = vmatpush.msra.mxu0 0.0
      %223 = vmatpush.msra.mxu0 0.0
      %224 = vmatpush.msra.mxu0 %v175
      %225 = vmatmul.f32.gmra.mxu0 %v170
      %v226 = vpop.f32.mrf.mxu0
      %v227 = vadd.f32 0.0, %v226
      %228 = vdwg.mxu0
      %229 = vmatpush.msra.mxu0 0.0
      %230 = vmatpush.msra.mxu0 0.0
      %231 = vmatpush.msra.mxu0 0.0
      %232 = vmatpush.msra.mxu0 0.0
      %233 = vmatpush.msra.mxu0 0.0
      %234 = vmatpush.msra.mxu0 0.0
      %235 = vmatpush.msra.mxu0 0.0
      %236 = vmatpush.msra.mxu0 0.0
      %237 = vmatpush.msra.mxu0 0.0
      %238 = vmatpush.msra.mxu0 0.0
      %239 = vmatpush.msra.mxu0 0.0
      %240 = vmatpush.msra.mxu0 0.0
      %241 = vmatpush.msra.mxu0 0.0
      %242 = vmatpush.msra.mxu0 0.0
      %243 = vmatpush.msra.mxu0 0.0
      %244 = vmatpush.msra.mxu0 %v177
      %245 = vmatmul.f32.gmra.mxu0 %v170
      %v246 = vpop.f32.mrf.mxu0
      %v247 = vadd.f32 0.0, %v246
      %248 = vdwg.mxu0
      %249 = vmatpush.msra.mxu0 0.0
      %250 = vmatpush.msra.mxu0 0.0
      %251 = vmatpush.msra.mxu0 0.0
      %252 = vmatpush.msra.mxu0 0.0
      %253 = vmatpush.msra.mxu0 0.0
      %254 = vmatpush.msra.mxu0 0.0
      %255 = vmatpush.msra.mxu0 0.0
      %256 = vmatpush.msra.mxu0 0.0
      %257 = vmatpush.msra.mxu0 0.0
      %258 = vmatpush.msra.mxu0 0.0
      %259 = vmatpush.msra.mxu0 0.0
      %260 = vmatpush.msra.mxu0 0.0
      %261 = vmatpush.msra.mxu0 0.0
      %262 = vmatpush.msra.mxu0 0.0
      %263 = vmatpush.msra.mxu0 0.0
      %264 = vmatpush.msra.mxu0 %v179
      %265 = vmatmul.f32.gmra.mxu0 %v170
      %v266 = vpop.f32.mrf.mxu0
      %v267 = vadd.f32 0.0, %v266
      %268 = vdwg.mxu0
      %269 = vmatpush.msra.mxu0 0.0
      %270 = vmatpush.msra.mxu0 0.0
      %271 = vmatpush.msra.mxu0 0.0
      %272 = vmatpush.msra.mxu0 0.0
      %273 = vmatpush.msra.mxu0 0.0
      %274 = vmatpush.msra.mxu0 0.0
      %275 = vmatpush.msra.mxu0 0.0
      %276 = vmatpush.msra.mxu0 0.0
      %277 = vmatpush.msra.mxu0 0.0
      %278 = vmatpush.msra.mxu0 0.0
      %279 = vmatpush.msra.mxu0 0.0
      %280 = vmatpush.msra.mxu0 0.0
      %281 = vmatpush.msra.mxu0 0.0
      %282 = vmatpush.msra.mxu0 0.0
      %283 = vmatpush.msra.mxu0 0.0
      %284 = vmatpush.msra.mxu0 %v181
      %285 = vmatmul.f32.gmra.mxu0 %v170
      %v286 = vpop.f32.mrf.mxu0
      %v287 = vadd.f32 0.0, %v286
      %288 = vdwg.mxu0
      %289 = vmatpush.msra.mxu0 0.0
      %290 = vmatpush.msra.mxu0 0.0
      %291 = vmatpush.msra.mxu0 0.0
      %292 = vmatpush.msra.mxu0 0.0
      %293 = vmatpush.msra.mxu0 0.0
      %294 = vmatpush.msra.mxu0 0.0
      %295 = vmatpush.msra.mxu0 0.0
      %296 = vmatpush.msra.mxu0 0.0
      %297 = vmatpush.msra.mxu0 0.0
      %298 = vmatpush.msra.mxu0 0.0
      %299 = vmatpush.msra.mxu0 0.0
      %300 = vmatpush.msra.mxu0 0.0
      %301 = vmatpush.msra.mxu0 0.0
      %302 = vmatpush.msra.mxu0 0.0
      %303 = vmatpush.msra.mxu0 0.0
      %304 = vmatpush.msra.mxu0 %v183
      %305 = vmatmul.f32.gmra.mxu0 %v170
      %v306 = vpop.f32.mrf.mxu0
      %v307 = vadd.f32 0.0, %v306
      %308 = vdwg.mxu0
      %309 = vmatpush.msra.mxu0 0.0
      %310 = vmatpush.msra.mxu0 0.0
      %311 = vmatpush.msra.mxu0 0.0
      %312 = vmatpush.msra.mxu0 0.0
      %313 = vmatpush.msra.mxu0 0.0
      %314 = vmatpush.msra.mxu0 0.0
      %315 = vmatpush.msra.mxu0 0.0
      %316 = vmatpush.msra.mxu0 0.0
      %317 = vmatpush.msra.mxu0 0.0
      %318 = vmatpush.msra.mxu0 0.0
      %319 = vmatpush.msra.mxu0 0.0
      %320 = vmatpush.msra.mxu0 0.0
      %321 = vmatpush.msra.mxu0 0.0
      %322 = vmatpush.msra.mxu0 0.0
      %323 = vmatpush.msra.mxu0 0.0
      %324 = vmatpush.msra.mxu0 %v185
      %325 = vmatmul.f32.gmra.mxu0 %v170
      %v326 = vpop.f32.mrf.mxu0
      %v327 = vadd.f32 0.0, %v326
      %328 = vdwg.mxu0
      %329 = vmatpush.msra.mxu0 0.0
      %330 = vmatpush.msra.mxu0 0.0
      %331 = vmatpush.msra.mxu0 0.0
      %332 = vmatpush.msra.mxu0 0.0
      %333 = vmatpush.msra.mxu0 0.0
      %334 = vmatpush.msra.mxu0 0.0
      %335 = vmatpush.msra.mxu0 0.0
      %336 = vmatpush.msra.mxu0 0.0
      %337 = vmatpush.msra.mxu0 0.0
      %338 = vmatpush.msra.mxu0 0.0
      %339 = vmatpush.msra.mxu0 0.0
      %340 = vmatpush.msra.mxu0 0.0
      %341 = vmatpush.msra.mxu0 0.0
      %342 = vmatpush.msra.mxu0 0.0
      %343 = vmatpush.msra.mxu0 0.0
      %344 = vmatpush.msra.mxu0 %v187
      %345 = vmatmul.f32.gmra.mxu0 %v170
      %v346 = vpop.f32.mrf.mxu0
      %v347 = vadd.f32 0.0, %v346
      %348 = vdwg.mxu0
      %v349 = vadd.f32 %v207, %v227
      %v350 = vadd.f32 %v349, %v247
      %v351 = vadd.f32 %v350, %v267
      %v352 = vadd.f32 %v351, %v287
      %v353 = vadd.f32 %v352, %v307
      %v354 = vadd.f32 %v353, %v327
      %v355 = vadd.f32 %v354, %v347
      %356 = vadd.xlane.f32.xlu0 %v355
      %v357 = vpop.xlane.xlu0 %356
      %v358 = vmul.f32 %v207, %v207
      %v359 = vmul.f32 %v227, %v227
      %v360 = vmul.f32 %v247, %v247
      %v361 = vmul.f32 %v267, %v267
      %v362 = vmul.f32 %v287, %v287
      %v363 = vmul.f32 %v307, %v307
      %v364 = vmul.f32 %v327, %v327
      %v365 = vmul.f32 %v347, %v347
      %v366 = vadd.f32 %v358, %v359
      %v367 = vadd.f32 %v366, %v360
      %v368 = vadd.f32 %v367, %v361
      %v369 = vadd.f32 %v368, %v362
      %v370 = vadd.f32 %v369, %v363
      %v371 = vadd.f32 %v370, %v364
      %v372 = vadd.f32 %v371, %v365
      %373 = vadd.xlane.f32.xlu0 %v372
      %v374 = vpop.xlane.xlu0 %373
      %vm375 = vcmask 7168
      %v376 = vsel %vm375, %v357, %v374
      %vm377 = vcmask 15360
      %378 = vst.msk [vmem:[%s143] sm:$0xff] %vm377, %v376
      %p379 = scmp.lt.s32.totalorder %s13, 1
      %s380 = scalar_select %p379, %s13, 1
      %s381 = smul.addr %s380, 8
      %s382 = scalar_lea.vmem %s2, %s381
      // Predicated region
      $region29: #{gating_block_forward.2} parent=27 // pred_check
        %p383 = pneg %p78
      $region30: #{gating_block_forward.2} parent=27 // pred_check_branch
        %385 = sbr.rel (%p383) target = $region32
      $region31: #{gating_block_forward.2} parent=27 // pred_region
        _
      $region32: #{gating_block_forward.2} parent=27 // pred_fallthru
        _
    $region28: #{gating_block_forward.2} parent=5 // pred_fallthru
      _
    %p386 = scmp.le.s32.totalorder 2, %s8
    // Predicated region
    $region33: #{gating_block_forward.2} parent=5 // pred_check
      %p387 = pneg %p386
    $region34: #{gating_block_forward.2} parent=5 // pred_check_branch
      %389 = sbr.rel (%p387) target = $region36
    $region35: #{gating_block_forward.2} parent=5 // pred_region
      %s390 = ssub.s32 %s8, 2
      // Predicated region
      $region37: #{gating_block_forward.2} parent=35 // pred_check
        %p391 = pneg %p84
      $region38: #{gating_block_forward.2} parent=35 // pred_check_branch
        %393 = sbr.rel (%p391) target = $region40
      $region39: #{gating_block_forward.2} parent=35 // pred_region
        %p394 = scmp.lt.s32.totalorder %s14, 1
        %s395 = scalar_select %p394, %s14, 1
        %s396 = smul.addr %s395, 8
        %s397 = scalar_lea.vmem %s2, %s396
      $region40: #{gating_block_forward.2} parent=35 // pred_fallthru
        _
    $region36: #{gating_block_forward.2} parent=5 // pred_fallthru
      _
  $region6: #{gating_block_forward.2} parent=0 // loop_footer
    %s12 = sadd.s32 1, %s8
  $region7: #{gating_block_forward.2} parent=0 // loop_footer_branch
    %7 = sbr.rel target = $region3
  $region8: #{gating_block_forward.2} parent=0 // loop_exit
    _

// kernel: gating_block_forward.3
$region0: #{gating_block_forward.3}
  #allocation0 [shape = 'u32[]', space=smem, size = 0x4, offset = 0x4, fixed_abs, tag = 'smem constant byte address 0x4 - core index']
  #allocation1 [shape = 'u32[72,128]{1,0:T(1,128)}', space=vmem, size = 0x9000, scoped, tag = 'internal scratch']
  %s0 = inlined_call_operand.vmem [shape: f32[8,4], index: 0, kind: input, shape index: {}]
  %s1 = inlined_call_operand.vmem [shape: f32[8,1], index: 1, kind: input, shape index: {}]
  %s2 = inlined_call_operand.vmem [shape: f32[8,1], index: 2, kind: input, shape index: {}]
  %s3 = inlined_call_operand.vmem [shape: f32[4,2048], index: 3, kind: input, shape index: {}]
  %s4 = inlined_call_operand.vmem [shape: f32[8,2048], index: 4, kind: output, shape index: {}]
  %s5 = sld [smem:[#allocation0]]
  $region49: #{gating_block_forward.3} parent=0
    _
  %s7 = ssub.s32 1, %s5
  %s8 = scalar_select 0, %s7, %s5
  loop: start=0, step=1, limit=4
  $region2: #{gating_block_forward.3} parent=0 // loop_pre_header
    _
  $region3: #{gating_block_forward.3} parent=0 // loop_header
    %s10 = sphi 0, %s14
    %p11 = scmp.ge.s32.totalorder %s10, 4
    %s18 = sphi 0, %s18
    %s20 = sphi 0, %s18
    %s21 = sphi 0, %s20
    %s35 = sphi 0, %s21
    %s39 = sphi 0, %s39
    %s41 = sphi 0, %s39
    %s42 = sphi 0, %s41
    %s56 = sphi 0, %s42
    %s60 = sphi 0, %s60
    %s62 = sphi 0, %s60
    %s63 = sphi 0, %s62
    %s77 = sphi 0, %s63
    %s83 = sphi 0, %s85
    %s86 = sphi 0, %s83
    %s87 = sphi 0, %s86
    %s103 = sphi 0, %s87
    %s109 = sphi 0, %s111
    %s112 = sphi 0, %s109
    %s113 = sphi 0, %s112
    %s129 = sphi 0, %s113
  $region4: #{gating_block_forward.3} parent=0 // loop_header_branch
    %13 = sbr.rel (%p11) target = $region8
  $region5: #{gating_block_forward.3} parent=0 // loop_body
    %s15 = ssub.s32 %s10, 1
    %s16 = ssub.s32 %s10, 2
    %s17 = sadd.s32 %s10, 1
    %s19 = sadd.s32 %s18, 1
    %p22 = scmp.eq.s32.totalorder %s10, 1
    %p23 = scmp.ne.s32.totalorder %s18, %s20
    %p24 = scmp.eq.s32.totalorder %s10, 0
    %p25 = por %p23, %p24
    %p26 = scmp.ne.s32.totalorder %s18, %s20
    %p27 = scmp.eq.s32.totalorder %s15, 1
    %p28 = por %p26, %p27
    %p29 = scmp.ne.s32.totalorder %s20, %s21
    %p30 = scmp.eq.s32.totalorder %s15, 0
    %p31 = por %p29, %p30
    %p32 = scmp.ne.s32.totalorder %s20, %s21
    %p33 = scmp.eq.s32.totalorder %s16, 1
    %p34 = por %p32, %p33
    %p36 = scmp.ne.s32.totalorder %s21, %s35
    %p37 = scmp.eq.s32.totalorder %s16, 0
    %p38 = por %p36, %p37
    %s40 = sadd.s32 %s39, 1
    %p43 = scmp.eq.s32.totalorder %s10, 1
    %p44 = scmp.ne.s32.totalorder %s39, %s41
    %p45 = scmp.eq.s32.totalorder %s10, 0
    %p46 = por %p44, %p45
    %p47 = scmp.ne.s32.totalorder %s39, %s41
    %p48 = scmp.eq.s32.totalorder %s15, 1
    %p49 = por %p47, %p48
    %p50 = scmp.ne.s32.totalorder %s41, %s42
    %p51 = scmp.eq.s32.totalorder %s15, 0
    %p52 = por %p50, %p51
    %p53 = scmp.ne.s32.totalorder %s41, %s42
    %p54 = scmp.eq.s32.totalorder %s16, 1
    %p55 = por %p53, %p54
    %p57 = scmp.ne.s32.totalorder %s42, %s56
    %p58 = scmp.eq.s32.totalorder %s16, 0
    %p59 = por %p57, %p58
    %s61 = sadd.s32 %s60, 1
    %p64 = scmp.eq.s32.totalorder %s10, 1
    %p65 = scmp.ne.s32.totalorder %s60, %s62
    %p66 = scmp.eq.s32.totalorder %s10, 0
    %p67 = por %p65, %p66
    %p68 = scmp.ne.s32.totalorder %s60, %s62
    %p69 = scmp.eq.s32.totalorder %s15, 1
    %p70 = por %p68, %p69
    %p71 = scmp.ne.s32.totalorder %s62, %s63
    %p72 = scmp.eq.s32.totalorder %s15, 0
    %p73 = por %p71, %p72
    %p74 = scmp.ne.s32.totalorder %s62, %s63
    %p75 = scmp.eq.s32.totalorder %s16, 1
    %p76 = por %p74, %p75
    %p78 = scmp.ne.s32.totalorder %s63, %s77
    %p79 = scmp.eq.s32.totalorder %s16, 0
    %p80 = por %p78, %p79
    %s81 = ssub.s32 %s10, %s17
    %p82 = scmp.eq.s32.totalorder %s81, 0
    %s84 = sadd.s32 %s83, 1
    %s85 = scalar_select %p82, %s83, %s84
    %p88 = pneg %p82
    %p89 = scmp.eq.s32.totalorder %s10, 1
    %p90 = por %p88, %p89
    %p91 = scmp.ne.s32.totalorder %s83, %s86
    %p92 = scmp.eq.s32.totalorder %s10, 0
    %p93 = por %p91, %p92
    %p94 = scmp.ne.s32.totalorder %s83, %s86
    %p95 = scmp.eq.s32.totalorder %s15, 1
    %p96 = por %p94, %p95
    %p97 = scmp.ne.s32.totalorder %s86, %s87
    %p98 = scmp.eq.s32.totalorder %s15, 0
    %p99 = por %p97, %p98
    %p100 = scmp.ne.s32.totalorder %s86, %s87
    %p101 = scmp.eq.s32.totalorder %s16, 1
    %p102 = por %p100, %p101
    %p104 = scmp.ne.s32.totalorder %s87, %s103
    %p105 = scmp.eq.s32.totalorder %s16, 0
    %p106 = por %p104, %p105
    %s107 = ssub.s32 %s10, %s17
    %p108 = scmp.eq.s32.totalorder %s107, 0
    %s110 = sadd.s32 %s109, 1
    %s111 = scalar_select %p108, %s109, %s110
    %p114 = pneg %p108
    %p115 = scmp.eq.s32.totalorder %s10, 1
    %p116 = por %p114, %p115
    %p117 = scmp.ne.s32.totalorder %s109, %s112
    %p118 = scmp.eq.s32.totalorder %s10, 0
    %p119 = por %p117, %p118
    %p120 = scmp.ne.s32.totalorder %s109, %s112
    %p121 = scmp.eq.s32.totalorder %s15, 1
    %p122 = por %p120, %p121
    %p123 = scmp.ne.s32.totalorder %s112, %s113
    %p124 = scmp.eq.s32.totalorder %s15, 0
    %p125 = por %p123, %p124
    %p126 = scmp.ne.s32.totalorder %s112, %s113
    %p127 = scmp.eq.s32.totalorder %s16, 1
    %p128 = por %p126, %p127
    %p130 = scmp.ne.s32.totalorder %s113, %s129
    %p131 = scmp.eq.s32.totalorder %s16, 0
    %p132 = por %p130, %p131
    %p133 = scmp.le.s32.totalorder 1, %s10
    %p134 = scmp.lt.s32.totalorder %s10, 3
    %p135 = pnand %p133, %p134
    %p136 = pneg %p135
    // Predicated region
    $region9: #{gating_block_forward.3} parent=5 // pred_check
      _
    $region10: #{gating_block_forward.3} parent=5 // pred_check_branch
      %138 = sbr.rel (%p135) target = $region12
    $region11: #{gating_block_forward.3} parent=5 // pred_region
      %s139 = ssub.s32 %s10, 1
      // Predicated region
      $region13: #{gating_block_forward.3} parent=11 // pred_check
        %p140 = pneg %p31
      $region14: #{gating_block_forward.3} parent=11 // pred_check_branch
        %142 = sbr.rel (%p140) target = $region16
      $region15: #{gating_block_forward.3} parent=11 // pred_region
        _
      $region16: #{gating_block_forward.3} parent=11 // pred_fallthru
        _
      // Predicated region
      $region17: #{gating_block_forward.3} parent=11 // pred_check
        %p143 = pneg %p52
      $region18: #{gating_block_forward.3} parent=11 // pred_check_branch
        %145 = sbr.rel (%p143) target = $region20
      $region19: #{gating_block_forward.3} parent=11 // pred_region
        _
      $region20: #{gating_block_forward.3} parent=11 // pred_fallthru
        _
      // Predicated region
      $region21: #{gating_block_forward.3} parent=11 // pred_check
        %p146 = pneg %p73
      $region22: #{gating_block_forward.3} parent=11 // pred_check_branch
        %148 = sbr.rel (%p146) target = $region24
      $region23: #{gating_block_forward.3} parent=11 // pred_region
        _
      $region24: #{gating_block_forward.3} parent=11 // pred_fallthru
        _
    $region12: #{gating_block_forward.3} parent=5 // pred_fallthru
      _
    %p149 = scmp.lt.s32.totalorder %s10, 2
    // Predicated region
    $region25: #{gating_block_forward.3} parent=5 // pred_check
      %p150 = pneg %p149
    $region26: #{gating_block_forward.3} parent=5 // pred_check_branch
      %152 = sbr.rel (%p150) target = $region28
    $region27: #{gating_block_forward.3} parent=5 // pred_region
      // Predicated region
      $region29: #{gating_block_forward.3} parent=27 // pred_check
        %p153 = pneg %p93
      $region30: #{gating_block_forward.3} parent=27 // pred_check_branch
        %155 = sbr.rel (%p153) target = $region32
      $region31: #{gating_block_forward.3} parent=27 // pred_region
        %s156 = smul.u32 8, %s10
        %p157 = scmp.lt.s32.totalorder %s156, 15
        %s158 = scalar_select %p157, %s156, 15
        %s159 = smul.addr %s158, 4
        %s160 = scalar_lea.vmem %s3, %s159
        %s161 = smul.u32 8, %s10
      $region32: #{gating_block_forward.3} parent=27 // pred_fallthru
        _
    $region28: #{gating_block_forward.3} parent=5 // pred_fallthru
      _
    %p162 = scmp.le.s32.totalorder 1, %s10
    %p163 = scmp.lt.s32.totalorder %s10, 3
    %p164 = pnand %p162, %p163
    %p165 = pneg %p164
    // Predicated region
    $region33: #{gating_block_forward.3} parent=5 // pred_check
      _
    $region34: #{gating_block_forward.3} parent=5 // pred_check_branch
      %167 = sbr.rel (%p164) target = $region36
    $region35: #{gating_block_forward.3} parent=5 // pred_region
      %s168 = ssub.s32 %s10, 1
      %p169 = pneg %p31
      %p170 = pneg %p28
      %p171 = pneg %p52
      %p172 = pneg %p49
      %p173 = pneg %p73
      %p174 = pneg %p70
      %s175 = smul.u32 8, %s15
      %p176 = scmp.lt.s32.totalorder %s175, 15
      %s177 = scalar_select %p176, %s175, 15
      %s178 = smul.addr %s177, 4
      %s179 = scalar_lea.vmem %s3, %s178
      %p180 = pneg %p99
      %p181 = pneg %p96
      %p182 = pneg %p125
      %p183 = pneg %p122
      %s184 = smul.u32 8, %s15
      %p185 = scmp.lt.s32.totalorder %s184, 15
      %s186 = scalar_select %p185, %s184, 15
      %s187 = smul.addr %s186, 8
      %s188 = scalar_lea.vmem %s4, %s187
      %s189 = smul.u32 8, %s15
      %p190 = scmp.lt.s32.totalorder %s189, 15
      %s191 = scalar_select %p190, %s189, 15
      %s192 = smul.addr %s191, 4
      %s193 = scalar_lea.vmem %s3, %s192
      %s194 = smul.u32 8, %s15
      %s195 = smul.u32 8, %s15
      %p196 = scmp.lt.s32.totalorder %s195, 15
      %s197 = scalar_select %p196, %s195, 15
      %s198 = smul.addr %s197, 8
      %s199 = scalar_lea.vmem %s4, %s198
      %s200 = smul.u32 8, %s15
      %v201 = vld [vmem:[%s0] sm:$0xff]
      %v202 = vld [vmem:[%s193] sm:$0xff]
      %v203 = vld [vmem:[%s193 + $0x8] sm:$0xff]
      %v204 = vld [vmem:[%s193 + $0x10] sm:$0xff]
      %v205 = vld [vmem:[%s193 + $0x18] sm:$0xff]
      %210 = vst [vmem:[#allocation1] ss:$2 sm:$0xff] %v202
      %s211 = scalar_lea.vmem [#allocation1], 16
      %212 = vst [vmem:[%s211] ss:$2 sm:$0xff] %v203
      %s213 = scalar_lea.vmem [#allocation1], 32
      %214 = vst [vmem:[%s213] ss:$2 sm:$0xff] %v204
      %s215 = scalar_lea.vmem [#allocation1], 48
      %216 = vst [vmem:[%s215] ss:$2 sm:$0xff] %v205
      %v217 = vld.sshfl [vmem:[#allocation1] sm:$0xff pattern:$0x75316420]
      %v218 = vld.sshfl [vmem:[#allocation1 + $0x8] sm:$0xff pattern:$0x75316420]
      %v219 = vld.sshfl [vmem:[#allocation1 + $0x10] sm:$0xff pattern:$0x75316420]
      %v220 = vld.sshfl [vmem:[#allocation1 + $0x18] sm:$0xff pattern:$0x75316420]
      %v221 = vld.sshfl [vmem:[#allocation1 + $0x20] sm:$0xff pattern:$0x75316420]
      %v222 = vld.sshfl [vmem:[#allocation1 + $0x28] sm:$0xff pattern:$0x75316420]
      %v223 = vld.sshfl [vmem:[#allocation1 + $0x30] sm:$0xff pattern:$0x75316420]
      %v224 = vld.sshfl [vmem:[#allocation1 + $0x38] sm:$0xff pattern:$0x75316420]
      %vm225 = vcmask 31744
      %v227 = vsel %vm225, %v201, 0
      %vm229 = vcmask 1043456
      %v230 = vsel %vm229, %v217, 0
      %v232 = vsel %vm229, %v218, 0
      %v234 = vsel %vm229, %v219, 0
      %v236 = vsel %vm229, %v220, 0
      %v238 = vsel %vm229, %v221, 0
      %v240 = vsel %vm229, %v222, 0
      %v242 = vsel %vm229, %v223, 0
      %v244 = vsel %vm229, %v224, 0
      %246 = vmatpush.msra.mxu0 0.0
      %247 = vmatpush.msra.mxu0 0.0
      %248 = vmatpush.msra.mxu0 0.0
      %249 = vmatpush.msra.mxu0 0.0
      %250 = vmatpush.msra.mxu0 0.0
      %251 = vmatpush.msra.mxu0 0.0
      %252 = vmatpush.msra.mxu0 0.0
      %253 = vmatpush.msra.mxu0 0.0
      %254 = vmatpush.msra.mxu0 0.0
      %255 = vmatpush.msra.mxu0 0.0
      %256 = vmatpush.msra.mxu0 0.0
      %257 = vmatpush.msra.mxu0 0.0
      %258 = vmatpush.msra.mxu0 0.0
      %259 = vmatpush.msra.mxu0 0.0
      %260 = vmatpush.msra.mxu0 0.0
      %261 = vmatpush.msra.mxu0 %v230
      %262 = vmatmul.f32.gmra.mxu0 %v227
      %v263 = vpop.f32.mrf.mxu0
      %v264 = vadd.f32 0.0, %v263
      %265 = vdwg.mxu0
      %266 = vmatpush.msra.mxu0 0.0
      %267 = vmatpush.msra.mxu0 0.0
      %268 = vmatpush.msra.mxu0 0.0
      %269 = vmatpush.msra.mxu0 0.0
      %270 = vmatpush.msra.mxu0 0.0
      %271 = vmatpush.msra.mxu0 0.0
      %272 = vmatpush.msra.mxu0 0.0
      %273 = vmatpush.msra.mxu0 0.0
      %274 = vmatpush.msra.mxu0 0.0
      %275 = vmatpush.msra.mxu0 0.0
      %276 = vmatpush.msra.mxu0 0.0
      %277 = vmatpush.msra.mxu0 0.0
      %278 = vmatpush.msra.mxu0 0.0
      %279 = vmatpush.msra.mxu0 0.0
      %280 = vmatpush.msra.mxu0 0.0
      %281 = vmatpush.msra.mxu0 %v232
      %282 = vmatmul.f32.gmra.mxu0 %v227
      %v283 = vpop.f32.mrf.mxu0
      %v284 = vadd.f32 0.0, %v283
      %285 = vdwg.mxu0
      %286 = vmatpush.msra.mxu0 0.0
      %287 = vmatpush.msra.mxu0 0.0
      %288 = vmatpush.msra.mxu0 0.0
      %289 = vmatpush.msra.mxu0 0.0
      %290 = vmatpush.msra.mxu0 0.0
      %291 = vmatpush.msra.mxu0 0.0
      %292 = vmatpush.msra.mxu0 0.0
      %293 = vmatpush.msra.mxu0 0.0
      %294 = vmatpush.msra.mxu0 0.0
      %295 = vmatpush.msra.mxu0 0.0
      %296 = vmatpush.msra.mxu0 0.0
      %297 = vmatpush.msra.mxu0 0.0
      %298 = vmatpush.msra.mxu0 0.0
      %299 = vmatpush.msra.mxu0 0.0
      %300 = vmatpush.msra.mxu0 0.0
      %301 = vmatpush.msra.mxu0 %v234
      %302 = vmatmul.f32.gmra.mxu0 %v227
      %v303 = vpop.f32.mrf.mxu0
      %v304 = vadd.f32 0.0, %v303
      %305 = vdwg.mxu0
      %306 = vmatpush.msra.mxu0 0.0
      %307 = vmatpush.msra.mxu0 0.0
      %308 = vmatpush.msra.mxu0 0.0
      %309 = vmatpush.msra.mxu0 0.0
      %310 = vmatpush.msra.mxu0 0.0
      %311 = vmatpush.msra.mxu0 0.0
      %312 = vmatpush.msra.mxu0 0.0
      %313 = vmatpush.msra.mxu0 0.0
      %314 = vmatpush.msra.mxu0 0.0
      %315 = vmatpush.msra.mxu0 0.0
      %316 = vmatpush.msra.mxu0 0.0
      %317 = vmatpush.msra.mxu0 0.0
      %318 = vmatpush.msra.mxu0 0.0
      %319 = vmatpush.msra.mxu0 0.0
      %320 = vmatpush.msra.mxu0 0.0
      %321 = vmatpush.msra.mxu0 %v236
      %322 = vmatmul.f32.gmra.mxu0 %v227
      %v323 = vpop.f32.mrf.mxu0
      %v324 = vadd.f32 0.0, %v323
      %325 = vdwg.mxu0
      %326 = vmatpush.msra.mxu0 0.0
      %327 = vmatpush.msra.mxu0 0.0
      %328 = vmatpush.msra.mxu0 0.0
      %329 = vmatpush.msra.mxu0 0.0
      %330 = vmatpush.msra.mxu0 0.0
      %331 = vmatpush.msra.mxu0 0.0
      %332 = vmatpush.msra.mxu0 0.0
      %333 = vmatpush.msra.mxu0 0.0
      %334 = vmatpush.msra.mxu0 0.0
      %335 = vmatpush.msra.mxu0 0.0
      %336 = vmatpush.msra.mxu0 0.0
      %337 = vmatpush.msra.mxu0 0.0
      %338 = vmatpush.msra.mxu0 0.0
      %339 = vmatpush.msra.mxu0 0.0
      %340 = vmatpush.msra.mxu0 0.0
      %341 = vmatpush.msra.mxu0 %v238
      %342 = vmatmul.f32.gmra.mxu0 %v227
      %v343 = vpop.f32.mrf.mxu0
      %v344 = vadd.f32 0.0, %v343
      %345 = vdwg.mxu0
      %346 = vmatpush.msra.mxu0 0.0
      %347 = vmatpush.msra.mxu0 0.0
      %348 = vmatpush.msra.mxu0 0.0
      %349 = vmatpush.msra.mxu0 0.0
      %350 = vmatpush.msra.mxu0 0.0
      %351 = vmatpush.msra.mxu0 0.0
      %352 = vmatpush.msra.mxu0 0.0
      %353 = vmatpush.msra.mxu0 0.0
      %354 = vmatpush.msra.mxu0 0.0
      %355 = vmatpush.msra.mxu0 0.0
      %356 = vmatpush.msra.mxu0 0.0
      %357 = vmatpush.msra.mxu0 0.0
      %358 = vmatpush.msra.mxu0 0.0
      %359 = vmatpush.msra.mxu0 0.0
      %360 = vmatpush.msra.mxu0 0.0
      %361 = vmatpush.msra.mxu0 %v240
      %362 = vmatmul.f32.gmra.mxu0 %v227
      %v363 = vpop.f32.mrf.mxu0
      %v364 = vadd.f32 0.0, %v363
      %365 = vdwg.mxu0
      %366 = vmatpush.msra.mxu0 0.0
      %367 = vmatpush.msra.mxu0 0.0
      %368 = vmatpush.msra.mxu0 0.0
      %369 = vmatpush.msra.mxu0 0.0
      %370 = vmatpush.msra.mxu0 0.0
      %371 = vmatpush.msra.mxu0 0.0
      %372 = vmatpush.msra.mxu0 0.0
      %373 = vmatpush.msra.mxu0 0.0
      %374 = vmatpush.msra.mxu0 0.0
      %375 = vmatpush.msra.mxu0 0.0
      %376 = vmatpush.msra.mxu0 0.0
      %377 = vmatpush.msra.mxu0 0.0
      %378 = vmatpush.msra.mxu0 0.0
      %379 = vmatpush.msra.mxu0 0.0
      %380 = vmatpush.msra.mxu0 0.0
      %381 = vmatpush.msra.mxu0 %v242
      %382 = vmatmul.f32.gmra.mxu0 %v227
      %v383 = vpop.f32.mrf.mxu0
      %v384 = vadd.f32 0.0, %v383
      %385 = vdwg.mxu0
      %386 = vmatpush.msra.mxu0 0.0
      %387 = vmatpush.msra.mxu0 0.0
      %388 = vmatpush.msra.mxu0 0.0
      %389 = vmatpush.msra.mxu0 0.0
      %390 = vmatpush.msra.mxu0 0.0
      %391 = vmatpush.msra.mxu0 0.0
      %392 = vmatpush.msra.mxu0 0.0
      %393 = vmatpush.msra.mxu0 0.0
      %394 = vmatpush.msra.mxu0 0.0
      %395 = vmatpush.msra.mxu0 0.0
      %396 = vmatpush.msra.mxu0 0.0
      %397 = vmatpush.msra.mxu0 0.0
      %398 = vmatpush.msra.mxu0 0.0
      %399 = vmatpush.msra.mxu0 0.0
      %400 = vmatpush.msra.mxu0 0.0
      %401 = vmatpush.msra.mxu0 %v244
      %402 = vmatmul.f32.gmra.mxu0 %v227
      %v403 = vpop.f32.mrf.mxu0
      %v404 = vadd.f32 0.0, %v403
      %405 = vdwg.mxu0
      %v406 = vld [vmem:[%s1] sm:$0xff]
      %408 = vset.pattern.permute.xlu0 0
      %409 = vperm.xlu0 %408, %v406
      %v410 = vpop.permute.xlu0 %409
      %v412 = vmul.f32 %v264, %v410
      %v413 = vmul.f32 %v284, %v410
      %v414 = vmul.f32 %v304, %v410
      %v415 = vmul.f32 %v324, %v410
      %v416 = vmul.f32 %v344, %v410
      %v417 = vmul.f32 %v364, %v410
      %v418 = vmul.f32 %v384, %v410
      %v419 = vmul.f32 %v404, %v410
      %v420 = vld [vmem:[%s2] sm:$0xff]
      %422 = vset.pattern.permute.xlu0 0
      %423 = vperm.xlu0 %422, %v420
      %v424 = vpop.permute.xlu0 %423
      %v426 = vadd.f32 %v412, %v424
      %v427 = vadd.f32 %v413, %v424
      %v428 = vadd.f32 %v414, %v424
      %v429 = vadd.f32 %v415, %v424
      %v430 = vadd.f32 %v416, %v424
      %v431 = vadd.f32 %v417, %v424
      %v432 = vadd.f32 %v418, %v424
      %v433 = vadd.f32 %v419, %v424
      %v434 = vmax.f32 %v426, 0.0
      %v435 = vmax.f32 %v427, 0.0
      %v436 = vmax.f32 %v428, 0.0
      %v437 = vmax.f32 %v429, 0.0
      %v438 = vmax.f32 %v430, 0.0
      %v439 = vmax.f32 %v431, 0.0
      %v440 = vmax.f32 %v432, 0.0
      %v441 = vmax.f32 %v433, 0.0
      %442 = vst [vmem:[%s199] sm:$0xff] %v434
      %443 = vst [vmem:[%s199 + $0x8] sm:$0xff] %v435
      %444 = vst [vmem:[%s199 + $0x10] sm:$0xff] %v436
      %445 = vst [vmem:[%s199 + $0x18] sm:$0xff] %v437
      %446 = vst [vmem:[%s199 + $0x20] sm:$0xff] %v438
      %447 = vst [vmem:[%s199 + $0x28] sm:$0xff] %v439
      %448 = vst [vmem:[%s199 + $0x30] sm:$0xff] %v440
      %449 = vst [vmem:[%s199 + $0x38] sm:$0xff] %v441
      %s450 = smul.u32 8, %s15
      %p451 = scmp.lt.s32.totalorder %s450, 15
      %s452 = scalar_select %p451, %s450, 15
      %s453 = smul.addr %s452, 8
      %s454 = scalar_lea.vmem %s4, %s453
      // Predicated region
      $region37: #{gating_block_forward.3} parent=35 // pred_check
        %p455 = pneg %p122
      $region38: #{gating_block_forward.3} parent=35 // pred_check_branch
        %457 = sbr.rel (%p455) target = $region40
      $region39: #{gating_block_forward.3} parent=35 // pred_region
        %s458 = smul.u32 8, %s15
      $region40: #{gating_block_forward.3} parent=35 // pred_fallthru
        _
    $region36: #{gating_block_forward.3} parent=5 // pred_fallthru
      _
    %p459 = scmp.le.s32.totalorder 2, %s10
    // Predicated region
    $region41: #{gating_block_forward.3} parent=5 // pred_check
      %p460 = pneg %p459
    $region42: #{gating_block_forward.3} parent=5 // pred_check_branch
      %462 = sbr.rel (%p460) target = $region44
    $region43: #{gating_block_forward.3} parent=5 // pred_region
      %s463 = ssub.s32 %s10, 2
      // Predicated region
      $region45: #{gating_block_forward.3} parent=43 // pred_check
        %p464 = pneg %p128
      $region46: #{gating_block_forward.3} parent=43 // pred_check_branch
        %466 = sbr.rel (%p464) target = $region48
      $region47: #{gating_block_forward.3} parent=43 // pred_region
        %s467 = smul.u32 8, %s16
        %p468 = scmp.lt.s32.totalorder %s467, 15
        %s469 = scalar_select %p468, %s467, 15
        %s470 = smul.addr %s469, 8
        %s471 = scalar_lea.vmem %s4, %s470
      $region48: #{gating_block_forward.3} parent=43 // pred_fallthru
        _
    $region44: #{gating_block_forward.3} parent=5 // pred_fallthru
      _
  $region6: #{gating_block_forward.3} parent=0 // loop_footer
    %s14 = sadd.s32 1, %s10
  $region7: #{gating_block_forward.3} parent=0 // loop_footer_branch
    %9 = sbr.rel target = $region3
  $region8: #{gating_block_forward.3} parent=0 // loop_exit
    _

</llo_original>
